<compile_context>
chip_gen: v5e
topology: v5e:2x2
jax: 0.10.0
libtpu: 0.0.40
codegen_flags: <defaults>
</compile_context>

<pallas_src>
import functools

import jax
import jax.numpy as jnp
from jax.experimental import pallas as pl
from jax.experimental.pallas import tpu as pltpu


# -----------------------------------------------------------------------------------------
# One-time parameter preparation (call once at init, NOT per forward).
# -----------------------------------------------------------------------------------------
def prepare_head_params(params, *, weight_dtype=jnp.bfloat16):
    """params: gamma/beta (D,), w (C, D) in PyTorch (out, in) layout, b (C,).
    Returns {"w": (D, Cp) weight_dtype, "b": (1, Cp) f32} with the LN affine folded in and
    the class dim zero-padded to a multiple of 128 (lane-dense stores)."""
    gamma = params["gamma"].astype(jnp.float32)          # (D,)
    beta = params["beta"].astype(jnp.float32)            # (D,)
    w = params["w"].astype(jnp.float32)                  # (C, D)
    b = params["b"].astype(jnp.float32)                  # (C,)
    C, D = w.shape
    Cp = ((C + 127) // 128) * 128                        # lane-dense padded class dim

    w_folded = w.T * gamma[:, None]                      # (D, C): LN scale folded into weight
    b_folded = b + beta @ w.T                            # (C,):   LN shift folded into bias

    w_p = jnp.zeros((D, Cp), weight_dtype).at[:, :C].set(w_folded.astype(weight_dtype))
    b_p = jnp.zeros((1, Cp), jnp.float32).at[0, :C].set(b_folded)
    return {"w": w_p, "b": b_p}


# -----------------------------------------------------------------------------------------
# Kernel body: LayerNorm (normalize only; affine is pre-folded) + one MXU matmul + bias.
# -----------------------------------------------------------------------------------------
def _cls_head_kernel(cls_ref, w_ref, b_ref, o_ref, *, eps):
    # cls_ref: (TB, D) CLS embeddings; w_ref: (D, TC) folded weight tile;
    # b_ref: (1, TC) folded bias tile; o_ref: (TB, TC) logits tile (lane-dense).
    x = cls_ref[...].astype(jnp.float32)                         # (TB, D)

    mean = jnp.mean(x, axis=-1, keepdims=True)
    cent = x - mean
    var = jnp.mean(cent * cent, axis=-1, keepdims=True)          # biased variance (PyTorch)
    xn = cent * jax.lax.rsqrt(var + eps)                         # affine folded into w/b

    y = jnp.dot(xn.astype(w_ref.dtype), w_ref[...],
                preferred_element_type=jnp.float32) + b_ref[...]
    o_ref[...] = y.astype(o_ref.dtype)


# -----------------------------------------------------------------------------------------
# Tiling helpers.
# -----------------------------------------------------------------------------------------
def _pick_batch_tile(B):
    """Batch tile TB and (possibly sublane-padded) batch Bp, with TB | Bp -> no ragged tile."""
    if B <= 256:
        return B, B                                   # whole batch in one tile
    if B % 256 == 0:
        return 256, B
    Bp = ((B + 7) // 8) * 8                           # sublane-align, then find a divisor
    for tb in (256, 128, 64, 32, 16, 8):
        if Bp % tb == 0:
            return tb, Bp
    return 8, Bp


def _pick_class_tile(Cp, max_tc):
    """Largest multiple-of-128 tile <= max_tc that divides Cp (Cp is a multiple of 128)."""
    max_tc = min(Cp, max_tc)
    for tc in range(max_tc, 0, -128):
        if Cp % tc == 0:
            return tc
    return 128


@functools.lru_cache(maxsize=1)
def _is_v7x():
    try:
        return "v7" in jax.devices()[0].device_kind.lower()
    except Exception:
        return False


# -----------------------------------------------------------------------------------------
# Forward wrapper (jit the whole thing: CLS gather, pad, kernel, un-pad slice in one region).
# -----------------------------------------------------------------------------------------
def classification_head(x, head, *, num_classes, eps=1e-5):
    """x: (B, N, D). head: output of prepare_head_params. Returns (B, num_classes) f32 logits."""
    B, _, D = x.shape
    Dw, Cp = head["w"].shape
    assert Dw == D, "prepared weight does not match input feature dim"

    cls = x[:, 0, :]                                  # CLS-token gather (fused in same jit)

    TB, Bp = _pick_batch_tile(B)
    if Bp != B:                                       # zero rows are LN-safe (var=0, eps>0)
        cls = jnp.pad(cls, ((0, Bp - B), (0, 0)))

    TC = _pick_class_tile(Cp, 1024)                   # <=1024 cols keeps tiles VMEM-friendly
    nj, ni = Cp // TC, Bp // TB
    if _is_v7x() and nj * ni == 1:
        # 2 TensorCores/chip: a 1-step grid would leave one idle -> split the class axis.
        max_half = (Cp // 2 // 128) * 128
        if max_half >= 128:
            TC = _pick_class_tile(Cp, max_half)
            nj = Cp // TC

    # Double-buffered per-step VMEM footprint; only raise the scoped limit if tiles need it.
    w_itemsize = jnp.dtype(head["w"].dtype).itemsize
    buf_bytes = 2 * (TB * D * 4 + D * TC * w_itemsize + TC * 4 + TB * TC * 4)
    cp_kwargs = {"dimension_semantics": ("parallel", "parallel")}
    if buf_bytes > (12 << 20):                        # approaching v5e's 16 MiB scoped default
        cp_kwargs["vmem_limit_bytes"] = int(min(buf_bytes * 1.5 + (2 << 20), 48 << 20))

    out_p = pl.pallas_call(
        functools.partial(_cls_head_kernel, eps=eps),
        out_shape=jax.ShapeDtypeStruct((Bp, Cp), jnp.float32),
        grid_spec=pltpu.PrefetchScalarGridSpec(
            num_scalar_prefetch=0,
            grid=(nj, ni),                            # class tiles outer, batch tiles inner
            in_specs=[
                pl.BlockSpec((TB, D), lambda j, i: (i, 0)),   # CLS tokens (row tile)
                pl.BlockSpec((D, TC), lambda j, i: (0, j)),   # folded weight tile (bf16)
                pl.BlockSpec((1, TC), lambda j, i: (0, j)),   # folded bias tile (f32)
            ],
            out_specs=pl.BlockSpec((TB, TC), lambda j, i: (i, j)),
        ),
        compiler_params=pltpu.CompilerParams(**cp_kwargs),
    )(cls, head["w"], head["b"])

    return out_p[:B, :num_classes]                    # strip batch/class padding


# -----------------------------------------------------------------------------------------
# Pure-JAX reference (PyTorch semantics, f32).
# -----------------------------------------------------------------------------------------
def _reference(x, params, eps=1e-5):
    cls = x[:, 0].astype(jnp.float32)
    mean = jnp.mean(cls, axis=-1, keepdims=True)
    var = jnp.mean((cls - mean) ** 2, axis=-1, keepdims=True)
    xn = (cls - mean) / jnp.sqrt(var + eps)
    xn = xn * params["gamma"] + params["beta"]
    return xn @ params["w"].T + params["b"]


if __name__ == "__main__":
    # Small shapes consistent with the module: batch=2, seq(with CLS)=8, input_dim=32, classes=10
    B, N, D, C = 2, 8, 32, 10

    key = jax.random.PRNGKey(0)
    kx, kg, kb, kw, kbi = jax.random.split(key, 5)

    x = jax.random.normal(kx, (B, N, D), dtype=jnp.float32)
    params = {
        "gamma": 1.0 + 0.1 * jax.random.normal(kg, (D,), jnp.float32),
        "beta": 0.1 * jax.random.normal(kb, (D,), jnp.float32),
        "w": 0.1 * jax.random.normal(kw, (C, D), jnp.float32),   # PyTorch Linear layout (out, in)
        "b": 0.1 * jax.random.normal(kbi, (C,), jnp.float32),
    }

    ref = _reference(x, params)
    head_fn = jax.jit(lambda xx, hh: classification_head(xx, hh, num_classes=C))

    # 1) f32-weight config: should match the f32 reference tightly.
    head_f32 = prepare_head_params(params, weight_dtype=jnp.float32)   # one-time prep
    out_f32 = jax.block_until_ready(head_fn(x, head_f32))
    assert out_f32.shape == (B, C)
    assert jnp.allclose(out_f32, ref, atol=1e-4, rtol=1e-4), "f32 path mismatch vs reference"

    # 2) Default bf16-weight config (production setting per perf feedback): bf16 tolerance.
    head_bf16 = prepare_head_params(params)                            # one-time prep
    out_bf16 = jax.block_until_ready(head_fn(x, head_bf16))
    assert out_bf16.shape == (B, C)
    assert jnp.allclose(out_bf16, ref, atol=3e-2, rtol=3e-2), "bf16 path mismatch vs reference"

    print("KERNEL_OK")
</pallas_src>

<mosaic_0001>
module attributes {stable_mosaic.version = 11 : i64} {
  func.func @_cls_head_kernel(%arg0: i32, %arg1: i32, %arg2: memref<2x32xf32, #tpu.memory_space<vmem>>, %arg3: memref<32x128xf32, #tpu.memory_space<vmem>>, %arg4: memref<1x128xf32, #tpu.memory_space<vmem>>, %arg5: memref<2x128xf32, #tpu.memory_space<vmem>>) attributes {dimension_semantics = [#tpu.dimension_semantics<parallel>, #tpu.dimension_semantics<parallel>], iteration_bounds = array<i64: 1, 1>, scalar_prefetch = 0 : i64, scratch_operands = 0 : i64, tpu.core_type = #tpu.core_type<tc>, window_params = [{transform_indices = @transform_0, window_bounds = array<i64: 2, 32>}, {transform_indices = @transform_1, window_bounds = array<i64: 32, 128>}, {transform_indices = @transform_2, window_bounds = array<i64: 1, 128>}, {transform_indices = @transform_3, window_bounds = array<i64: 2, 128>}]} {
    %c0 = arith.constant 0 : index
    %c0_0 = arith.constant 0 : index
    %0 = vector.load %arg2[%c0, %c0_0] : memref<2x32xf32, #tpu.memory_space<vmem>>, vector<2x32xf32>
    %cst = arith.constant dense<0.000000e+00> : vector<2xf32>
    %1 = vector.multi_reduction <add>, %0, %cst [1] : vector<2x32xf32> to vector<2xf32>
    %2 = vector.shape_cast %1 : vector<2xf32> to vector<2x1xf32>
    %cst_1 = arith.constant 3.200000e+01 : f32
    %3 = vector.broadcast %cst_1 : f32 to vector<2x1xf32>
    %4 = arith.divf %2, %3 : vector<2x1xf32>
    %5 = vector.broadcast %4 : vector<2x1xf32> to vector<2x32xf32>
    %6 = arith.subf %0, %5 : vector<2x32xf32>
    %7 = arith.mulf %6, %6 : vector<2x32xf32>
    %cst_2 = arith.constant dense<0.000000e+00> : vector<2xf32>
    %8 = vector.multi_reduction <add>, %7, %cst_2 [1] : vector<2x32xf32> to vector<2xf32>
    %9 = vector.shape_cast %8 : vector<2xf32> to vector<2x1xf32>
    %cst_3 = arith.constant 3.200000e+01 : f32
    %10 = vector.broadcast %cst_3 : f32 to vector<2x1xf32>
    %11 = arith.divf %9, %10 : vector<2x1xf32>
    %cst_4 = arith.constant 9.99999974E-6 : f32
    %12 = vector.broadcast %cst_4 : f32 to vector<2x1xf32>
    %13 = arith.addf %11, %12 : vector<2x1xf32>
    %14 = math.rsqrt %13 : vector<2x1xf32>
    %15 = vector.broadcast %14 : vector<2x1xf32> to vector<2x32xf32>
    %16 = arith.mulf %6, %15 : vector<2x32xf32>
    %c0_5 = arith.constant 0 : index
    %c0_6 = arith.constant 0 : index
    %17 = vector.load %arg3[%c0_5, %c0_6] : memref<32x128xf32, #tpu.memory_space<vmem>>, vector<32x128xf32>
    %cst_7 = arith.constant dense<0.000000e+00> : vector<2x128xf32>
    %18 = tpu.matmul %16, %17, %cst_7 {dimension_numbers = #tpu.dot_dimension_numbers<[1], [0], [0], [1], [0, 0, 1, 1], [], []>} : vector<2x32xf32>, vector<32x128xf32>, vector<2x128xf32> -> vector<2x128xf32>
    %c0_8 = arith.constant 0 : index
    %c0_9 = arith.constant 0 : index
    %19 = vector.load %arg4[%c0_8, %c0_9] : memref<1x128xf32, #tpu.memory_space<vmem>>, vector<1x128xf32>
    %20 = vector.broadcast %19 : vector<1x128xf32> to vector<2x128xf32>
    %21 = arith.addf %18, %20 : vector<2x128xf32>
    %c0_10 = arith.constant 0 : index
    %c0_11 = arith.constant 0 : index
    %22 = vector.load %arg5[%c0_10, %c0_11] : memref<2x128xf32, #tpu.memory_space<vmem>>, vector<2x128xf32>
    tpu.vector_store %arg5[%c0_10, %c0_11], %21 {strides = array<i32>} : memref<2x128xf32, #tpu.memory_space<vmem>>, vector<2x128xf32>,
    return
  }
  func.func @transform_0(%arg0: i32, %arg1: i32) -> (i32, i32) {
    %c0_i32 = arith.constant 0 : i32
    %c0_i32_0 = arith.constant 0 : i32
    return %arg1, %c0_i32 : i32, i32
  }
  func.func @transform_1(%arg0: i32, %arg1: i32) -> (i32, i32) {
    %c0_i32 = arith.constant 0 : i32
    %c0_i32_0 = arith.constant 0 : i32
    return %c0_i32, %arg0 : i32, i32
  }
  func.func @transform_2(%arg0: i32, %arg1: i32) -> (i32, i32) {
    %c0_i32 = arith.constant 0 : i32
    %c0_i32_0 = arith.constant 0 : i32
    return %c0_i32, %arg0 : i32, i32
  }
  func.func @transform_3(%arg0: i32, %arg1: i32) -> (i32, i32) {
    %c0_i32 = arith.constant 0 : i32
    return %arg1, %arg0 : i32, i32
  }
}

</mosaic_0001>

<llo_original>
// kernel: _lambda_.1
$region0: #{_lambda_.1}
  #allocation0 [shape = 'u32[]', space=smem, size = 0x4, offset = 0x4, fixed_abs, tag = 'smem constant byte address 0x4 - core index']
  #allocation1 [shape = 'u32[72,128]{1,0:T(1,128)}', space=vmem, size = 0x9000, scoped, tag = 'internal scratch']
  %s0 = inlined_call_operand.vmem [shape: f32[2,32], index: 0, kind: input, shape index: {}]
  %s1 = inlined_call_operand.hbm [shape: f32[32,128], index: 1, kind: input, shape index: {}]
  %s2 = inlined_call_operand.vmem [shape: f32[1,128], index: 2, kind: input, shape index: {}]
  %s3 = inlined_call_operand.hbm [shape: f32[2,128], index: 3, kind: output, shape index: {}]
  %s4 = sld [smem:[#allocation0]]
  $region26: #{_lambda_.1} parent=0
    _
  %s6 = ssub.s32 1, %s4
  %s7 = scalar_select 0, %s6, %s4
  $region1: #{_lambda_.1} parent=0
    #allocation2 [shape = 'u8[16384]{0}', space=vmem, size = 0x4000, scoped, tag = 'input window, operand 1, single buffered']
    #allocation3 [shape = 's32[1]{0}', space=sflag, size = 0x4, scoped, tag = 'scoped memory for _lambda_.1']
    #allocation4 [shape = 's32[1]{0}', space=sflag, size = 0x4, scoped, tag = 'scoped memory for _lambda_.1']
    #allocation5 [shape = 'u8[1024]{0}', space=vmem, size = 0x400, scoped, tag = 'output window, operand 0, single buffered']
    %8 = vsyncpa [#allocation3], 0
    %9 = vsyncpa [#allocation4], 0
    // Predicated region
    $region2: #{_lambda_.1} parent=1 // pred_check
      _
    $region3: #{_lambda_.1} parent=1 // pred_check_branch
      %11 = sbr.rel (0) target = $region5
    $region4: #{_lambda_.1} parent=1 // pred_region
      _
    $region5: #{_lambda_.1} parent=1 // pred_fallthru
      _
    // Predicated region
    $region6: #{_lambda_.1} parent=1 // pred_check
      _
    $region7: #{_lambda_.1} parent=1 // pred_check_branch
      %13 = sbr.rel (0) target = $region9
    $region8: #{_lambda_.1} parent=1 // pred_region
      %15 = vsyncadd [#allocation3], 0
      %s16 = sshll.u32 %s1, 4
      %s17 = int_to_ptr.hbm [resolvable:$true] %s16
      %s18 = sshll.u32 [#allocation2], 4
      %s19 = int_to_ptr.vmem [resolvable:$true] %s18
      %24 = dma.hbm_to_vmem [thread:$0]  %s17, 512, %s19, [#allocation3], 128, 128, 8
    $region9: #{_lambda_.1} parent=1 // pred_fallthru
      _
    // Predicated region
    $region10: #{_lambda_.1} parent=1 // pred_check
      _
    $region11: #{_lambda_.1} parent=1 // pred_check_branch
      %26 = sbr.rel (0) target = $region13
    $region12: #{_lambda_.1} parent=1 // pred_region
      _
    $region13: #{_lambda_.1} parent=1 // pred_fallthru
      _
    // Predicated region
    $region14: #{_lambda_.1} parent=1 // pred_check
      _
    $region15: #{_lambda_.1} parent=1 // pred_check_branch
      %28 = sbr.rel (0) target = $region17
    $region16: #{_lambda_.1} parent=1 // pred_region
      %30 = dma.done [#allocation3], 512
    $region17: #{_lambda_.1} parent=1 // pred_fallthru
      _
    %v31 = vld [vmem:[%s0] sm:$0x3]
    %vm32 = vcmask 254976
    %v33 = vsel %vm32, %v31, 0.0
    %34 = vadd.xlane.f32.xlu0 %v33
    %v35 = vpop.xlane.xlu0 %34
    %v36 = vrcp.pop 32.0
    %v37 = vmul.f32 32.0, %v36
    %v38 = vsub.f32 1.0, %v37
    %v39 = vmul.f32 %v36, %v38
    %v40 = vadd.f32 %v36, %v39
    %vm41 = vweird.f32 %v36
    %v42 = vsel %vm41, %v36, %v40
    %v43 = vmul.f32 %v35, %v42
    %v44 = vsub.f32 %v31, %v43
    %v45 = vmul.f32 %v44, %v44
    %v46 = vsel %vm32, %v45, 0.0
    %47 = vadd.xlane.f32.xlu0 %v46
    %v48 = vpop.xlane.xlu0 %47
    %v49 = vmul.f32 %v48, %v42
    %v50 = vadd.f32 %v49, 1e-05
    %v51 = vrsqrt.pop %v50
    %v52 = vmul.f32 %v51, %v50
    %v53 = vmul.f32 %v52, %v51
    %v54 = vmul.f32 0.5, %v53
    %v55 = vsub.f32 1.5, %v54
    %v56 = vmul.f32 %v51, %v55
    %vm57 = vweird.f32 %v50
    %vm58 = vweird.f32 %v51
    %vm59 = vmor %vm57, %vm58
    %v60 = vsel %vm59, %v51, %v56
    %v61 = vmul.f32 %v44, %v60
    %v62 = vld [vmem:[#allocation2] sm:$0xff]
    %v63 = vld [vmem:[#allocation2 + $0x8] sm:$0xff]
    %v64 = vld [vmem:[#allocation2 + $0x10] sm:$0xff]
    %v65 = vld [vmem:[#allocation2 + $0x18] sm:$0xff]
    %v66 = vld [vmem:[%s2] sm:$0x1]
    %v68 = vperm.slane %v66, 0
    %vm70 = vcmask 261120
    %v72 = vsel %vm70, %v61, 0
    %74 = vmatpush.msra.mxu0 0.0
    %75 = vmatpush.msra.mxu0 0.0
    %76 = vmatpush.msra.mxu0 0.0
    %77 = vmatpush.msra.mxu0 0.0
    %78 = vmatpush.msra.mxu0 0.0
    %79 = vmatpush.msra.mxu0 0.0
    %80 = vmatpush.msra.mxu0 0.0
    %81 = vmatpush.msra.mxu0 0.0
    %82 = vmatpush.msra.mxu0 0.0
    %83 = vmatpush.msra.mxu0 0.0
    %84 = vmatpush.msra.mxu0 0.0
    %85 = vmatpush.msra.mxu0 0.0
    %86 = vmatpush.msra.mxu0 %v65
    %87 = vmatpush.msra.mxu0 %v64
    %88 = vmatpush.msra.mxu0 %v63
    %89 = vmatpush.msra.mxu0 %v62
    %90 = vmatmul.f32.gmra.mxu0 %v72
    %v91 = vpop.f32.mrf.mxu0
    %v92 = vadd.f32 %v68, %v91
    %93 = vdwg.mxu0
    %94 = vst [vmem:[#allocation5] sm:$0x3] %v92
    // Predicated region
    $region18: #{_lambda_.1} parent=1 // pred_check
      _
    $region19: #{_lambda_.1} parent=1 // pred_check_branch
      %96 = sbr.rel (0) target = $region21
    $region20: #{_lambda_.1} parent=1 // pred_region
      %98 = vsyncadd [#allocation4], 0
      %s100 = sshll.u32 [#allocation5], 4
      %s101 = int_to_ptr.vmem [resolvable:$true] %s100
      %s102 = sshll.u32 %s3, 4
      %s103 = int_to_ptr.hbm [resolvable:$true] %s102
      %105 = dma.vmem_to_hbm [thread:$0]  %s101, 32, %s103, [#allocation4]
    $region21: #{_lambda_.1} parent=1 // pred_fallthru
      _
    // Predicated region
    $region22: #{_lambda_.1} parent=1 // pred_check
      _
    $region23: #{_lambda_.1} parent=1 // pred_check_branch
      %107 = sbr.rel (0) target = $region25
    $region24: #{_lambda_.1} parent=1 // pred_region
      %109 = dma.done [#allocation4], 32
    $region25: #{_lambda_.1} parent=1 // pred_fallthru
      _
    %110 = vsyncpa [#allocation3], 1
    %111 = vsyncpa [#allocation4], 1

</llo_original>
